<compile_context>
chip_gen: v5e
topology: v5e:2x2
jax: 0.10.0
libtpu: 0.0.40
codegen_flags: <defaults>
</compile_context>

<pallas_src>
import functools

import jax
import jax.numpy as jnp
from jax.experimental import pallas as pl
from jax.experimental.pallas import tpu as pltpu


def _round_up(x, m):
    return ((x + m - 1) // m) * m


def _cdiv(a, b):
    return (a + b - 1) // b


# -----------------------------------------------------------------------------
# Kernels
# -----------------------------------------------------------------------------
def _scaled_mse_kernel_full_d(x_ref, t_ref, nrl_ref, *, min_error_norm):
    """1-D grid over batch tiles; the full feature dim is resident per step."""
    # f32 math regardless of input dtype (v5e has no bf16 VPU/EUP).
    x = x_ref[...].astype(jnp.float32)
    t = t_ref[...].astype(jnp.float32)
    diff = x - t
    sq_error = jnp.sum(diff * diff, axis=1, keepdims=True)
    t_norm = jnp.maximum(jnp.sqrt(jnp.sum(t * t, axis=1, keepdims=True)),
                         min_error_norm)
    x_norm = jnp.maximum(jnp.sqrt(jnp.sum(x * x, axis=1, keepdims=True)),
                         min_error_norm)
    nrl_ref[...] = sq_error / (t_norm + x_norm)


def _scaled_mse_kernel_tiled_d(x_ref, t_ref, nrl_ref, sq_acc, tn_acc, xn_acc, *,
                               min_error_norm, feat_dim, block_d, mask_d):
    """2-D grid (batch parallel, feature reduction) with P3 init/finalize."""
    k = pl.program_id(1)

    @pl.when(k == 0)
    def _():
        sq_acc[...] = jnp.zeros_like(sq_acc)
        tn_acc[...] = jnp.zeros_like(tn_acc)
        xn_acc[...] = jnp.zeros_like(xn_acc)

    x = x_ref[...].astype(jnp.float32)
    t = t_ref[...].astype(jnp.float32)
    if mask_d:
        # Partial trailing feature tile: zero the out-of-range columns (the
        # pipeline fills them with garbage); zeros are neutral for all sums.
        col = k * block_d + jax.lax.broadcasted_iota(jnp.int32, x.shape, 1)
        valid = col < feat_dim
        x = jnp.where(valid, x, 0.0)
        t = jnp.where(valid, t, 0.0)

    diff = x - t
    sq_acc[...] += jnp.sum(diff * diff, axis=1, keepdims=True)   # sum (x-t)^2
    tn_acc[...] += jnp.sum(t * t, axis=1, keepdims=True)         # sum t^2
    xn_acc[...] += jnp.sum(x * x, axis=1, keepdims=True)         # sum x^2

    @pl.when(k == pl.num_programs(1) - 1)
    def _():
        t_norm = jnp.maximum(jnp.sqrt(tn_acc[...]), min_error_norm)
        x_norm = jnp.maximum(jnp.sqrt(xn_acc[...]), min_error_norm)
        nrl_ref[...] = sq_acc[...] / (t_norm + x_norm)


# -----------------------------------------------------------------------------
# Wrapper
# -----------------------------------------------------------------------------
def scaled_mse_loss(x, t, min_error_norm=0.5, *, block_b=None, block_d=None,
                    vmem_limit_bytes=32 * 1024 * 1024):
    """Returns (loss_scalar, non_reduced_loss[B, 1])."""
    assert x.shape == t.shape and x.ndim == 2
    B, D = x.shape
    itemsize = max(x.dtype.itemsize, t.dtype.itemsize)

    # Bytes available for the pipeline buffers (2 inputs x 2 buffers each),
    # leaving headroom inside vmem_limit_bytes for compiler scratch.
    buf_budget = int(0.75 * vmem_limit_bytes)

    # --- Feature tile: prefer the full feature dim (exempt from the (8,128)
    #     rule) whenever a minimal 8-row tile fits the budget -> 1-D grid,
    #     no accumulators, no feature-axis padding ever.
    full_d_fits = (2 * 2 * 8 * D * itemsize) <= buf_budget
    if block_d is None:
        block_d = D if full_d_fits else 2048
    if block_d >= D:
        block_d = D
    else:
        block_d = max(128, (block_d // 128) * 128)
    full_d = (block_d == D)

    # --- Batch tile: largest that fits the budget, then snapped to
    #     ceil(B / num_tiles) so the trailing partial tile stays small, with
    #     >= 2-4 tiles forced so both v7x TensorCores get work.
    if block_b is None:
        per_row_bytes = 2 * 2 * block_d * itemsize
        block_b_max = max(8, min((buf_budget // per_row_bytes) // 8 * 8, 1024))
        min_tiles = min(4, _cdiv(B, 8))
        num_tiles = max(_cdiv(B, block_b_max), min_tiles, 1)
        block_b = _round_up(_cdiv(B, num_tiles), 8)
    block_b = max(8, (block_b // 8) * 8)
    block_b = min(block_b, _round_up(B, 8))

    grid_b = _cdiv(B, block_b)   # trailing tile may be partial: OOB input rows
                                 # are garbage, their output rows are discarded.

    if full_d:
        kernel = functools.partial(_scaled_mse_kernel_full_d,
                                   min_error_norm=float(min_error_norm))
        grid = (grid_b,)
        in_specs = [pl.BlockSpec((block_b, D), lambda i: (i, 0)),
                    pl.BlockSpec((block_b, D), lambda i: (i, 0))]
        out_specs = pl.BlockSpec((block_b, 1), lambda i: (i, 0))
        scratch_shapes = []
        dim_sem = ("parallel",)
    else:
        grid_d = _cdiv(D, block_d)
        kernel = functools.partial(_scaled_mse_kernel_tiled_d,
                                   min_error_norm=float(min_error_norm),
                                   feat_dim=D, block_d=block_d,
                                   mask_d=(D % block_d != 0))
        grid = (grid_b, grid_d)
        in_specs = [pl.BlockSpec((block_b, block_d), lambda i, k: (i, k)),
                    pl.BlockSpec((block_b, block_d), lambda i, k: (i, k))]
        out_specs = pl.BlockSpec((block_b, 1), lambda i, k: (i, 0))
        scratch_shapes = [pltpu.VMEM((block_b, 1), jnp.float32),
                          pltpu.VMEM((block_b, 1), jnp.float32),
                          pltpu.VMEM((block_b, 1), jnp.float32)]
        dim_sem = ("parallel", "arbitrary")

    nrl = pl.pallas_call(
        kernel,
        out_shape=jax.ShapeDtypeStruct((B, 1), jnp.float32),
        grid_spec=pltpu.PrefetchScalarGridSpec(
            num_scalar_prefetch=0,
            grid=grid,
            in_specs=in_specs,
            out_specs=out_specs,
            scratch_shapes=scratch_shapes,
        ),
        compiler_params=pltpu.CompilerParams(
            dimension_semantics=dim_sem,
            vmem_limit_bytes=int(vmem_limit_bytes),
        ),
    )(x, t)

    loss = jnp.mean(nrl)         # scalar mean outside the kernel (tiny traffic)
    return loss, nrl


# -----------------------------------------------------------------------------
# Pure-JAX reference + self-check
# -----------------------------------------------------------------------------
def _ref_scaled_mse_loss(x, t, min_error_norm=0.5):
    x = x.astype(jnp.float32)
    t = t.astype(jnp.float32)
    sq_error = jnp.sum((x - t) ** 2, axis=1, keepdims=True)
    t_norm = jnp.maximum(jnp.linalg.norm(t, axis=1, keepdims=True), min_error_norm)
    x_norm = jnp.maximum(jnp.linalg.norm(x, axis=1, keepdims=True), min_error_norm)
    nrl = sq_error / (t_norm + x_norm)
    return jnp.mean(nrl), nrl


if __name__ == "__main__":
    key = jax.random.PRNGKey(0)
    k1, k2, k3, k4, k5, k6 = jax.random.split(key, 6)
    min_error_norm = 0.5

    # Case 1: small aligned shapes -> full-D fast path, 1-D grid over batch.
    x1 = jax.random.normal(k1, (8, 32), dtype=jnp.float32)
    t1 = jax.random.normal(k2, (8, 32), dtype=jnp.float32)
    loss1, nrl1 = scaled_mse_loss(x1, t1, min_error_norm)
    jax.block_until_ready((loss1, nrl1))
    ref_loss1, ref_nrl1 = _ref_scaled_mse_loss(x1, t1, min_error_norm)
    assert jnp.allclose(loss1, ref_loss1, rtol=1e-5, atol=1e-5), (loss1, ref_loss1)
    assert jnp.allclose(nrl1, ref_nrl1, rtol=1e-5, atol=1e-5)

    # Case 2: unaligned B and D with forced feature tiling -> exercises the
    # cdiv grid (partial trailing batch tile) and in-kernel feature masking.
    x2 = jax.random.normal(k3, (10, 300), dtype=jnp.float32)
    t2 = jax.random.normal(k4, (10, 300), dtype=jnp.float32)
    loss2, nrl2 = scaled_mse_loss(x2, t2, min_error_norm, block_b=8, block_d=128)
    jax.block_until_ready((loss2, nrl2))
    ref_loss2, ref_nrl2 = _ref_scaled_mse_loss(x2, t2, min_error_norm)
    assert jnp.allclose(loss2, ref_loss2, rtol=1e-5, atol=1e-5), (loss2, ref_loss2)
    assert jnp.allclose(nrl2, ref_nrl2, rtol=1e-5, atol=1e-5)

    # Case 3: bf16 inputs -> dtype-aware tile sizing, f32 math in-kernel.
    x3 = jax.random.normal(k5, (24, 64), dtype=jnp.bfloat16)
    t3 = jax.random.normal(k6, (24, 64), dtype=jnp.bfloat16)
    loss3, nrl3 = scaled_mse_loss(x3, t3, min_error_norm)
    jax.block_until_ready((loss3, nrl3))
    ref_loss3, ref_nrl3 = _ref_scaled_mse_loss(x3, t3, min_error_norm)
    assert jnp.allclose(loss3, ref_loss3, rtol=1e-3, atol=1e-3), (loss3, ref_loss3)
    assert jnp.allclose(nrl3, ref_nrl3, rtol=1e-3, atol=1e-3)

    print("KERNEL_OK")
</pallas_src>

<mosaic_0001>
module attributes {stable_mosaic.version = 11 : i64} {
  func.func @_scaled_mse_kernel_full_d(%arg0: i32, %arg1: memref<8x32xf32, #tpu.memory_space<vmem>>, %arg2: memref<8x32xf32, #tpu.memory_space<vmem>>, %arg3: memref<8x1xf32, #tpu.memory_space<vmem>>) attributes {dimension_semantics = [#tpu.dimension_semantics<parallel>], iteration_bounds = array<i64: 1>, scalar_prefetch = 0 : i64, scratch_operands = 0 : i64, tpu.core_type = #tpu.core_type<tc>, window_params = [{transform_indices = @transform_0, window_bounds = array<i64: 8, 32>}, {transform_indices = @transform_1, window_bounds = array<i64: 8, 32>}, {transform_indices = @transform_2, window_bounds = array<i64: 8, 1>}]} {
    %c0 = arith.constant 0 : index
    %c0_0 = arith.constant 0 : index
    %0 = vector.load %arg1[%c0, %c0_0] : memref<8x32xf32, #tpu.memory_space<vmem>>, vector<8x32xf32>
    %c0_1 = arith.constant 0 : index
    %c0_2 = arith.constant 0 : index
    %1 = vector.load %arg2[%c0_1, %c0_2] : memref<8x32xf32, #tpu.memory_space<vmem>>, vector<8x32xf32>
    %2 = arith.subf %0, %1 : vector<8x32xf32>
    %3 = arith.mulf %2, %2 : vector<8x32xf32>
    %cst = arith.constant dense<0.000000e+00> : vector<8xf32>
    %4 = vector.multi_reduction <add>, %3, %cst [1] : vector<8x32xf32> to vector<8xf32>
    %5 = vector.shape_cast %4 : vector<8xf32> to vector<8x1xf32>
    %6 = arith.mulf %1, %1 : vector<8x32xf32>
    %cst_3 = arith.constant dense<0.000000e+00> : vector<8xf32>
    %7 = vector.multi_reduction <add>, %6, %cst_3 [1] : vector<8x32xf32> to vector<8xf32>
    %8 = vector.shape_cast %7 : vector<8xf32> to vector<8x1xf32>
    %9 = math.sqrt %8 : vector<8x1xf32>
    %cst_4 = arith.constant 5.000000e-01 : f32
    %10 = vector.broadcast %cst_4 : f32 to vector<8x1xf32>
    %11 = arith.maximumf %9, %10 : vector<8x1xf32>
    %12 = arith.mulf %0, %0 : vector<8x32xf32>
    %cst_5 = arith.constant dense<0.000000e+00> : vector<8xf32>
    %13 = vector.multi_reduction <add>, %12, %cst_5 [1] : vector<8x32xf32> to vector<8xf32>
    %14 = vector.shape_cast %13 : vector<8xf32> to vector<8x1xf32>
    %15 = math.sqrt %14 : vector<8x1xf32>
    %cst_6 = arith.constant 5.000000e-01 : f32
    %16 = vector.broadcast %cst_6 : f32 to vector<8x1xf32>
    %17 = arith.maximumf %15, %16 : vector<8x1xf32>
    %18 = arith.addf %11, %17 : vector<8x1xf32>
    %19 = arith.divf %5, %18 : vector<8x1xf32>
    %c0_7 = arith.constant 0 : index
    %c0_8 = arith.constant 0 : index
    %20 = vector.load %arg3[%c0_7, %c0_8] : memref<8x1xf32, #tpu.memory_space<vmem>>, vector<8x1xf32>
    tpu.vector_store %arg3[%c0_7, %c0_8], %19 {strides = array<i32>} : memref<8x1xf32, #tpu.memory_space<vmem>>, vector<8x1xf32>,
    return
  }
  func.func @transform_0(%arg0: i32) -> (i32, i32) {
    %c0_i32 = arith.constant 0 : i32
    %c0_i32_0 = arith.constant 0 : i32
    return %arg0, %c0_i32 : i32, i32
  }
  func.func @transform_1(%arg0: i32) -> (i32, i32) {
    %c0_i32 = arith.constant 0 : i32
    %c0_i32_0 = arith.constant 0 : i32
    return %arg0, %c0_i32 : i32, i32
  }
  func.func @transform_2(%arg0: i32) -> (i32, i32) {
    %c0_i32 = arith.constant 0 : i32
    %c0_i32_0 = arith.constant 0 : i32
    return %arg0, %c0_i32 : i32, i32
  }
}

</mosaic_0001>

<llo_original>
// kernel: tpu_custom_call.1
$region0: #{tpu_custom_call.1}
  #allocation0 [shape = 'u32[]', space=smem, size = 0x4, offset = 0x4, fixed_abs, tag = 'smem constant byte address 0x4 - core index']
  #allocation1 [shape = 'u32[72,128]{1,0:T(1,128)}', space=vmem, size = 0x9000, scoped, tag = 'internal scratch']
  %s0 = inlined_call_operand.hbm [shape: f32[8,32], index: 0, kind: input, shape index: {}]
  %s1 = inlined_call_operand.hbm [shape: f32[8,32], index: 1, kind: input, shape index: {}]
  %s2 = inlined_call_operand.vmem [shape: f32[8,1], index: 2, kind: output, shape index: {}]
  %s3 = sld [smem:[#allocation0]]
  $region26: #{tpu_custom_call.1} parent=0
    _
  %s5 = ssub.s32 1, %s3
  %s6 = scalar_select 0, %s5, %s3
  $region1: #{tpu_custom_call.1} parent=0
    #allocation2 [shape = 'u8[4096]{0}', space=vmem, size = 0x1000, scoped, tag = 'input window, operand 0, single buffered']
    #allocation3 [shape = 's32[1]{0}', space=sflag, size = 0x4, scoped, tag = 'scoped memory for tpu_custom_call.1']
    #allocation4 [shape = 'u8[4096]{0}', space=vmem, size = 0x1000, scoped, tag = 'input window, operand 1, single buffered']
    #allocation5 [shape = 's32[1]{0}', space=sflag, size = 0x4, scoped, tag = 'scoped memory for tpu_custom_call.1']
    %7 = vsyncpa [#allocation3], 0
    %8 = vsyncpa [#allocation5], 0
    // Predicated region
    $region2: #{tpu_custom_call.1} parent=1 // pred_check
      _
    $region3: #{tpu_custom_call.1} parent=1 // pred_check_branch
      %10 = sbr.rel (0) target = $region5
    $region4: #{tpu_custom_call.1} parent=1 // pred_region
      %12 = vsyncadd [#allocation3], 0
      %s14 = sshll.u32 %s0, 4
      %s15 = int_to_ptr.hbm [resolvable:$true] %s14
      %s16 = sshll.u32 [#allocation2], 4
      %s17 = int_to_ptr.vmem [resolvable:$true] %s16
      %19 = dma.hbm_to_vmem [thread:$0]  %s15, 128, %s17, [#allocation3]
    $region5: #{tpu_custom_call.1} parent=1 // pred_fallthru
      _
    // Predicated region
    $region6: #{tpu_custom_call.1} parent=1 // pred_check
      _
    $region7: #{tpu_custom_call.1} parent=1 // pred_check_branch
      %21 = sbr.rel (0) target = $region9
    $region8: #{tpu_custom_call.1} parent=1 // pred_region
      %23 = vsyncadd [#allocation5], 0
      %s25 = sshll.u32 %s1, 4
      %s26 = int_to_ptr.hbm [resolvable:$true] %s25
      %s27 = sshll.u32 [#allocation4], 4
      %s28 = int_to_ptr.vmem [resolvable:$true] %s27
      %30 = dma.hbm_to_vmem [thread:$0]  %s26, 128, %s28, [#allocation5]
    $region9: #{tpu_custom_call.1} parent=1 // pred_fallthru
      _
    // Predicated region
    $region10: #{tpu_custom_call.1} parent=1 // pred_check
      _
    $region11: #{tpu_custom_call.1} parent=1 // pred_check_branch
      %32 = sbr.rel (0) target = $region13
    $region12: #{tpu_custom_call.1} parent=1 // pred_region
      %34 = dma.done [#allocation3], 128
    $region13: #{tpu_custom_call.1} parent=1 // pred_fallthru
      _
    // Predicated region
    $region14: #{tpu_custom_call.1} parent=1 // pred_check
      _
    $region15: #{tpu_custom_call.1} parent=1 // pred_check_branch
      %36 = sbr.rel (0) target = $region17
    $region16: #{tpu_custom_call.1} parent=1 // pred_region
      %38 = dma.done [#allocation5], 128
    $region17: #{tpu_custom_call.1} parent=1 // pred_fallthru
      _
    %v39 = vld [vmem:[#allocation2] sm:$0xff]
    %v40 = vld [vmem:[#allocation4] sm:$0xff]
    %v41 = vsub.f32 %v39, %v40
    %v42 = vmul.f32 %v41, %v41
    %vm43 = vcmask 261120
    %v44 = vsel %vm43, %v42, 0.0
    %45 = vadd.xlane.f32.xlu0 %v44
    %v46 = vpop.xlane.xlu0 %45
    %v47 = vmul.f32 %v40, %v40
    %v48 = vsel %vm43, %v47, 0.0
    %49 = vadd.xlane.f32.xlu0 %v48
    %v50 = vpop.xlane.xlu0 %49
    %v51 = vrsqrt.pop %v50
    %v52 = vmul.f32 %v51, %v50
    %v53 = vmul.f32 %v52, %v51
    %v54 = vmul.f32 0.5, %v53
    %v55 = vsub.f32 1.5, %v54
    %v56 = vmul.f32 %v51, %v55
    %v57 = vmul.f32 %v50, %v56
    %vm58 = vcmp.eq.f32.partialorder %v50, inf
    %v59 = vsel %vm58, %v50, %v57
    %vm60 = vcmp.eq.f32.partialorder %v50, 0.0
    %v61 = vand.u32 %v50, 2147483648
    %v62 = vsel %vm60, %v61, %v59
    %v63 = vmax.f32 %v62, 0.5
    %v64 = vmul.f32 %v39, %v39
    %v65 = vsel %vm43, %v64, 0.0
    %66 = vadd.xlane.f32.xlu0 %v65
    %v67 = vpop.xlane.xlu0 %66
    %v68 = vrsqrt.pop %v67
    %v69 = vmul.f32 %v68, %v67
    %v70 = vmul.f32 %v69, %v68
    %v71 = vmul.f32 0.5, %v70
    %v72 = vsub.f32 1.5, %v71
    %v73 = vmul.f32 %v68, %v72
    %v74 = vmul.f32 %v67, %v73
    %vm75 = vcmp.eq.f32.partialorder %v67, inf
    %v76 = vsel %vm75, %v67, %v74
    %vm77 = vcmp.eq.f32.partialorder %v67, 0.0
    %v78 = vand.u32 %v67, 2147483648
    %v79 = vsel %vm77, %v78, %v76
    %v80 = vmax.f32 %v79, 0.5
    %v81 = vadd.f32 %v63, %v80
    %v82 = vrcp.pop %v81
    %v83 = vmul.f32 %v81, %v82
    %v84 = vsub.f32 1.0, %v83
    %v85 = vmul.f32 %v82, %v84
    %v86 = vadd.f32 %v82, %v85
    %vm87 = vweird.f32 %v81
    %vm88 = vweird.f32 %v82
    %vm89 = vmor %vm87, %vm88
    %v90 = vsel %vm89, %v82, %v86
    %v91 = vand.u32 2147483647, %v81
    %vm92 = vcmp.eq.f32.partialorder %v91, 8.507059e+37
    %v93 = vand.u32 %v81, 2147483648
    %v94 = vor.u32 1.1754944e-38, %v93
    %v95 = vsel %vm92, %v94, %v90
    %v96 = vmul.f32 %v46, %v95
    %vm97 = vcmask 7168
    %98 = vst.msk [vmem:[%s2] sm:$0xff] %vm97, %v96
    // Predicated region
    $region18: #{tpu_custom_call.1} parent=1 // pred_check
      _
    $region19: #{tpu_custom_call.1} parent=1 // pred_check_branch
      %100 = sbr.rel (0) target = $region21
    $region20: #{tpu_custom_call.1} parent=1 // pred_region
      _
    $region21: #{tpu_custom_call.1} parent=1 // pred_fallthru
      _
    // Predicated region
    $region22: #{tpu_custom_call.1} parent=1 // pred_check
      _
    $region23: #{tpu_custom_call.1} parent=1 // pred_check_branch
      %102 = sbr.rel (0) target = $region25
    $region24: #{tpu_custom_call.1} parent=1 // pred_region
      _
    $region25: #{tpu_custom_call.1} parent=1 // pred_fallthru
      _
    %103 = vsyncpa [#allocation3], 1
    %104 = vsyncpa [#allocation5], 1

</llo_original>
